<compile_context>
chip_gen: v7x
topology: tpu7x:2x2x1
jax: 0.10.0
libtpu: 0.0.40
codegen_flags: <defaults>
</compile_context>

<pallas_src>
import functools

import jax
import jax.numpy as jnp
from jax.experimental import pallas as pl
from jax.experimental.pallas import tpu as pltpu


def _round_up(n, m):
    return ((n + m - 1) // m) * m


def _vmem_capacity_bytes():
    """Physical per-core VMEM with a conservative fallback (v7x = 64 MiB)."""
    try:
        cap = getattr(pltpu.get_tpu_info(), "vmem_capacity_bytes", None)
        if cap:
            return int(cap)
    except Exception:
        pass
    return 64 << 20


def _decoder_kernel(x_ref, w1_ref, b1_ref, w2_ref, b2_ref, o_ref, h_ref, *,
                    compute_dtype):
    # fc1 + tanh only once per batch tile (first output-feature step); the
    # activation is staged in a compute-dtype VMEM scratch and reused across
    # the inner (arbitrary) D axis.
    @pl.when(pl.program_id(1) == 0)
    def _():
        x = x_ref[...].astype(compute_dtype)                 # `.float()` / bf16 cast
        h = jnp.dot(x, w1_ref[...], preferred_element_type=jnp.float32)  # fc1 (MXU)
        h = jnp.tanh(h + b1_ref[...])                        # bias + tanh in f32
        h_ref[...] = h.astype(compute_dtype)

    y = jnp.dot(h_ref[...], w2_ref[...], preferred_element_type=jnp.float32)  # fc2 (MXU)
    o_ref[...] = (y + b2_ref[...]).astype(o_ref.dtype)


def decoder_forward(x, w1, b1, w2, b2, *, block_b=512,
                    compute_dtype=jnp.float32, out_dtype=jnp.float32):
    """x: (B, L); w1: (L, H); b1: (H,)/(1,H); w2: (H, D); b2: (D,)/(1,D).

    compute_dtype=jnp.bfloat16 is recommended on v6e/v7x (MXU-native; f32
    accumulation and f32 bias/tanh are kept).  Defaults are f32 so the result
    matches the fp32 PyTorch reference.
    """
    B, L = x.shape
    Lw, H = w1.shape
    Hw, D = w2.shape
    assert L == Lw and H == Hw

    # ---- feature padding -----------------------------------------------------
    # Hidden dim: always lane-pad (internal only -> no extra HBM output traffic).
    Hp = _round_up(H, 128)
    # Output dim: pad only narrow outputs; wide non-multiples of 128 keep a
    # masked tail store instead of a padded writeback + wrapper slice copy.
    if D % 128 == 0 or D >= 512:
        Dp = D
    else:
        Dp = _round_up(D, 128)

    w1p = jnp.pad(w1, ((0, 0), (0, Hp - H))).astype(compute_dtype)
    b1p = jnp.pad(jnp.reshape(b1, (1, H)), ((0, 0), (0, Hp - H)))       # stays f32
    w2p = jnp.pad(w2, ((0, Hp - H), (0, Dp - D))).astype(compute_dtype)
    b2p = jnp.pad(jnp.reshape(b2, (1, D)), ((0, 0), (0, Dp - D)))       # stays f32

    # ---- generation-aware VMEM budget & tile selection -------------------------
    budget = int(_vmem_capacity_bytes() * 0.85)
    wsz = jnp.dtype(compute_dtype).itemsize
    xsz = jnp.dtype(x.dtype).itemsize
    osz = jnp.dtype(out_dtype).itemsize

    def vmem_estimate(bb_, bd_):
        return (2 * bb_ * L * xsz                   # streamed x tiles (double-buffered)
                + 2 * (L * Hp * wsz + Hp * 4)       # resident W1 / b1
                + 2 * (Hp * bd_ * wsz + bd_ * 4)    # streamed W2 / b2 tiles
                + 2 * bb_ * bd_ * osz               # streamed out tiles
                + bb_ * Hp * wsz)                   # tanh activation scratch

    # Batch tile: full block_b (MXU-aligned) for large batches, minimal otherwise.
    bb = block_b if B >= block_b else _round_up(B, 8)
    bb_cands = []
    b_ = bb
    while True:
        bb_cands.append(b_)
        if b_ <= 8:
            break
        b_ = max(8, _round_up(b_ // 2, 8))
    # Output-feature tile: prefer full Dp (single inner step), else 128-multiples.
    bd_cands = [Dp] + [c for c in (4096, 2048, 1024, 512, 256, 128) if c < Dp]

    sel = None
    for b_try in bb_cands:        # for a given bb, shrink bd first (W2 streams once
        for d_try in bd_cands:    # per batch tile, so keeping bb large wins on HBM)
            if vmem_estimate(b_try, d_try) <= budget:
                sel = (b_try, d_try)
                break
        if sel is not None:
            break
    if sel is None:
        sel = (bb_cands[-1], bd_cands[-1])
    bb, bd = sel

    grid = (pl.cdiv(B, bb), pl.cdiv(Dp, bd))
    vmem_limit = min(budget, max(32 << 20, 2 * vmem_estimate(bb, bd)))

    kernel = functools.partial(_decoder_kernel, compute_dtype=compute_dtype)
    out = pl.pallas_call(
        kernel,
        out_shape=jax.ShapeDtypeStruct((B, Dp), out_dtype),
        grid=grid,
        in_specs=[
            pl.BlockSpec((bb, L), lambda i, j: (i, 0)),    # streamed x tile (held over j)
            pl.BlockSpec((L, Hp), lambda i, j: (0, 0)),    # resident W1 (pre-cast)
            pl.BlockSpec((1, Hp), lambda i, j: (0, 0)),    # resident b1 (f32)
            pl.BlockSpec((Hp, bd), lambda i, j: (0, j)),   # streamed W2 column block
            pl.BlockSpec((1, bd), lambda i, j: (0, j)),    # streamed b2 block (f32)
        ],
        out_specs=pl.BlockSpec((bb, bd), lambda i, j: (i, j)),
        scratch_shapes=[pltpu.VMEM((bb, Hp), compute_dtype)],
        compiler_params=pltpu.CompilerParams(
            dimension_semantics=("parallel", "arbitrary"),
            vmem_limit_bytes=vmem_limit,
        ),
    )(x, w1p, b1p, w2p, b2p)
    return out if Dp == D else out[:, :D]


def xavier_normal(key, fan_in, fan_out):
    # torch.nn.init.xavier_normal_: std = sqrt(2 / (fan_in + fan_out))
    std = jnp.sqrt(2.0 / (fan_in + fan_out))
    # PyTorch Linear weight is (out, in); generate in that shape, transpose for x @ W
    w_torch_layout = jax.random.normal(key, (fan_out, fan_in), jnp.float32) * std
    return w_torch_layout.T  # (in, out)


def make_decoder_params(key, input_size, latent_size):
    H = input_size // 2
    k1, k2 = jax.random.split(key)
    w1 = xavier_normal(k1, latent_size, H)          # (L, H)
    b1 = jnp.zeros((1, H), jnp.float32)
    w2 = xavier_normal(k2, H, input_size)           # (H, D)
    b2 = jnp.zeros((1, input_size), jnp.float32)
    return w1, b1, w2, b2


if __name__ == "__main__":
    # Small shapes consistent with the module: latent -> input//2 -> input
    batch = 8
    input_size = 32
    latent_size = 8

    key = jax.random.PRNGKey(0)
    kx, kp = jax.random.split(key)
    x = jax.random.normal(kx, (batch, latent_size), jnp.float32)
    w1, b1, w2, b2 = make_decoder_params(kp, input_size, latent_size)

    # fp32 compute path: matches the PyTorch fp32 reference.
    out = decoder_forward(x, w1, b1, w2, b2)
    out = jax.block_until_ready(out)

    ref = jnp.dot(jnp.tanh(jnp.dot(x, w1) + b1), w2) + b2
    assert out.shape == (batch, input_size)
    assert jnp.allclose(out, ref, atol=1e-5, rtol=1e-5), float(jnp.max(jnp.abs(out - ref)))

    # bf16 MXU path (recommended default for v6e/v7x callers); f32 accumulation
    # and f32 bias/tanh kept, so accuracy stays within bf16 rounding.
    out_bf16 = decoder_forward(x, w1, b1, w2, b2, compute_dtype=jnp.bfloat16)
    out_bf16 = jax.block_until_ready(out_bf16)
    assert out_bf16.shape == (batch, input_size)
    assert jnp.allclose(out_bf16, ref, atol=5e-2, rtol=5e-2), \
        float(jnp.max(jnp.abs(out_bf16 - ref)))

    print("KERNEL_OK")
</pallas_src>

<mosaic_0001>
module attributes {stable_mosaic.version = 11 : i64} {
  func.func @_decoder_kernel(%arg0: i32, %arg1: i32, %arg2: memref<8x8xf32, #tpu.memory_space<vmem>>, %arg3: memref<8x128xf32, #tpu.memory_space<vmem>>, %arg4: memref<1x128xf32, #tpu.memory_space<vmem>>, %arg5: memref<128x128xf32, #tpu.memory_space<vmem>>, %arg6: memref<1x128xf32, #tpu.memory_space<vmem>>, %arg7: memref<8x128xf32, #tpu.memory_space<vmem>>, %arg8: memref<8x128xf32, #tpu.memory_space<vmem>>) attributes {dimension_semantics = [#tpu.dimension_semantics<parallel>, #tpu.dimension_semantics<arbitrary>], iteration_bounds = array<i64: 1, 1>, scalar_prefetch = 0 : i64, scratch_operands = 1 : i64, tpu.core_type = #tpu.core_type<tc>, window_params = [{transform_indices = @transform_0, window_bounds = array<i64: 8, 8>}, {pipeline_mode = #tpu.pipeline_mode<synchronous>, transform_indices = @transform_1, window_bounds = array<i64: 8, 128>}, {pipeline_mode = #tpu.pipeline_mode<synchronous>, transform_indices = @transform_2, window_bounds = array<i64: 1, 128>}, {transform_indices = @transform_3, window_bounds = array<i64: 128, 128>}, {transform_indices = @transform_4, window_bounds = array<i64: 1, 128>}, {transform_indices = @transform_5, window_bounds = array<i64: 8, 128>}]} {
    %c0_i32 = arith.constant 0 : i32
    %0 = arith.cmpi eq, %arg1, %c0_i32 : i32
    %1 = arith.extui %0 : i1 to i32
    %c0_i32_0 = arith.constant 0 : i32
    %2 = arith.cmpi ne, %1, %c0_i32_0 : i32
    scf.if %2 {
      %c0_8 = arith.constant 0 : index
      %c0_9 = arith.constant 0 : index
      %10 = vector.load %arg2[%c0_8, %c0_9] : memref<8x8xf32, #tpu.memory_space<vmem>>, vector<8x8xf32>
      %c0_10 = arith.constant 0 : index
      %c0_11 = arith.constant 0 : index
      %11 = vector.load %arg3[%c0_10, %c0_11] : memref<8x128xf32, #tpu.memory_space<vmem>>, vector<8x128xf32>
      %cst_12 = arith.constant dense<0.000000e+00> : vector<8x128xf32>
      %12 = tpu.matmul %10, %11, %cst_12 {dimension_numbers = #tpu.dot_dimension_numbers<[1], [0], [0], [1], [0, 0, 1, 1], [], []>} : vector<8x8xf32>, vector<8x128xf32>, vector<8x128xf32> -> vector<8x128xf32>
      %c0_13 = arith.constant 0 : index
      %c0_14 = arith.constant 0 : index
      %13 = vector.load %arg4[%c0_13, %c0_14] : memref<1x128xf32, #tpu.memory_space<vmem>>, vector<1x128xf32>
      %14 = vector.broadcast %13 : vector<1x128xf32> to vector<8x128xf32>
      %15 = arith.addf %12, %14 : vector<8x128xf32>
      %16 = math.tanh %15 : vector<8x128xf32>
      %c0_15 = arith.constant 0 : index
      %c0_16 = arith.constant 0 : index
      %17 = vector.load %arg8[%c0_15, %c0_16] : memref<8x128xf32, #tpu.memory_space<vmem>>, vector<8x128xf32>
      tpu.vector_store %arg8[%c0_15, %c0_16], %16 {strides = array<i32>} : memref<8x128xf32, #tpu.memory_space<vmem>>, vector<8x128xf32>,
    } else {
    }
    %c0 = arith.constant 0 : index
    %c0_1 = arith.constant 0 : index
    %3 = vector.load %arg8[%c0, %c0_1] : memref<8x128xf32, #tpu.memory_space<vmem>>, vector<8x128xf32>
    %c0_2 = arith.constant 0 : index
    %c0_3 = arith.constant 0 : index
    %4 = vector.load %arg5[%c0_2, %c0_3] : memref<128x128xf32, #tpu.memory_space<vmem>>, vector<128x128xf32>
    %cst = arith.constant dense<0.000000e+00> : vector<8x128xf32>
    %5 = tpu.matmul %3, %4, %cst {dimension_numbers = #tpu.dot_dimension_numbers<[1], [0], [0], [1], [0, 0, 1, 1], [], []>} : vector<8x128xf32>, vector<128x128xf32>, vector<8x128xf32> -> vector<8x128xf32>
    %c0_4 = arith.constant 0 : index
    %c0_5 = arith.constant 0 : index
    %6 = vector.load %arg6[%c0_4, %c0_5] : memref<1x128xf32, #tpu.memory_space<vmem>>, vector<1x128xf32>
    %7 = vector.broadcast %6 : vector<1x128xf32> to vector<8x128xf32>
    %8 = arith.addf %5, %7 : vector<8x128xf32>
    %c0_6 = arith.constant 0 : index
    %c0_7 = arith.constant 0 : index
    %9 = vector.load %arg7[%c0_6, %c0_7] : memref<8x128xf32, #tpu.memory_space<vmem>>, vector<8x128xf32>
    tpu.vector_store %arg7[%c0_6, %c0_7], %8 {strides = array<i32>} : memref<8x128xf32, #tpu.memory_space<vmem>>, vector<8x128xf32>,
    return
  }
  func.func @transform_0(%arg0: i32, %arg1: i32) -> (i32, i32) {
    %c0_i32 = arith.constant 0 : i32
    %c0_i32_0 = arith.constant 0 : i32
    return %arg0, %c0_i32 : i32, i32
  }
  func.func @transform_1(%arg0: i32, %arg1: i32) -> (i32, i32) {
    %c0_i32 = arith.constant 0 : i32
    %c0_i32_0 = arith.constant 0 : i32
    %c0_i32_1 = arith.constant 0 : i32
    return %c0_i32, %c0_i32_0 : i32, i32
  }
  func.func @transform_2(%arg0: i32, %arg1: i32) -> (i32, i32) {
    %c0_i32 = arith.constant 0 : i32
    %c0_i32_0 = arith.constant 0 : i32
    %c0_i32_1 = arith.constant 0 : i32
    return %c0_i32, %c0_i32_0 : i32, i32
  }
  func.func @transform_3(%arg0: i32, %arg1: i32) -> (i32, i32) {
    %c0_i32 = arith.constant 0 : i32
    %c0_i32_0 = arith.constant 0 : i32
    return %c0_i32, %arg1 : i32, i32
  }
  func.func @transform_4(%arg0: i32, %arg1: i32) -> (i32, i32) {
    %c0_i32 = arith.constant 0 : i32
    %c0_i32_0 = arith.constant 0 : i32
    return %c0_i32, %arg1 : i32, i32
  }
  func.func @transform_5(%arg0: i32, %arg1: i32) -> (i32, i32) {
    %c0_i32 = arith.constant 0 : i32
    return %arg0, %arg1 : i32, i32
  }
}

</mosaic_0001>

<llo_original>
// kernel: tpu_custom_call.1
$region0: #{tpu_custom_call.1}
  #allocation0 [shape = 'u32[]', space=smem, size = 0x4, offset = 0x4, fixed_abs, tag = 'smem constant byte address 0x4 - core index']
  #allocation1 [shape = 'u32[144,128]{1,0:T(1,128)}', space=vmem, size = 0x12000, scoped, tag = 'internal scratch']
  #allocation2 [shape = 'f32[8,128]{1,0:T(8,128)}', space=vmem, size = 0x1000, scoped, tag = 'scratch operand']
  %s0 = inlined_call_operand.hbm [shape: f32[8,8], index: 0, kind: input, shape index: {}]
  %s1 = inlined_call_operand.hbm [shape: f32[8,128], index: 1, kind: input, shape index: {}]
  %s2 = inlined_call_operand.vmem [shape: f32[1,128], index: 2, kind: input, shape index: {}]
  %s3 = inlined_call_operand.hbm [shape: f32[128,128], index: 3, kind: input, shape index: {}]
  %s4 = inlined_call_operand.vmem [shape: f32[1,128], index: 4, kind: input, shape index: {}]
  %s5 = inlined_call_operand.hbm [shape: f32[8,128], index: 5, kind: output, shape index: {}]
  %s6 = sld [smem:[#allocation0]]
  $region46: #{tpu_custom_call.1} parent=0
    _
  %s8 = ssub.s32 1, %s6
  %s9 = scalar_select 0, %s8, %s6
  $region1: #{tpu_custom_call.1} parent=0
    #allocation3 [shape = 'u8[4096]{0}', space=vmem, size = 0x1000, scoped, tag = 'input window, operand 0, single buffered']
    #allocation4 [shape = 's32[1]{0}', space=sflag, size = 0x4, scoped, tag = 'scoped memory for tpu_custom_call.1']
    #allocation5 [shape = 's32[1]{0}', space=sflag, size = 0x4, scoped, tag = 'scoped memory for tpu_custom_call.1']
    #allocation6 [shape = 'u8[4096]{0}', space=vmem, size = 0x1000, scoped, tag = 'input window, operand 1, single buffered']
    #allocation7 [shape = 's32[1]{0}', space=sflag, size = 0x4, scoped, tag = 'scoped memory for tpu_custom_call.1']
    #allocation8 [shape = 'u8[65536]{0}', space=vmem, size = 0x10000, scoped, tag = 'input window, operand 3, single buffered']
    #allocation9 [shape = 'u8[4096]{0}', space=vmem, size = 0x1000, scoped, tag = 'output window, operand 0, single buffered']
    %10 = vsyncpa [#allocation4], 0
    %11 = vsyncpa [#allocation7], 0
    %12 = vsyncpa [#allocation5], 0
    // Predicated region
    $region2: #{tpu_custom_call.1} parent=1 // pred_check
      _
    $region3: #{tpu_custom_call.1} parent=1 // pred_check_branch
      %14 = sbr.rel (0) target = $region5
    $region4: #{tpu_custom_call.1} parent=1 // pred_region
      %s16 = ssub.s32 128, 128
      %17 = vsyncadd [#allocation4], %s16
      %s19 = sshll.u32 [#allocation3], 4
      %s20 = int_to_ptr.vmem [resolvable:$true] %s19
      %22 = dma.hbm_to_vmem [thread:$0]  %s0, 128, %s20, [#allocation4]
    $region5: #{tpu_custom_call.1} parent=1 // pred_fallthru
      _
    // Predicated region
    $region6: #{tpu_custom_call.1} parent=1 // pred_check
      _
    $region7: #{tpu_custom_call.1} parent=1 // pred_check_branch
      %24 = sbr.rel (0) target = $region9
    $region8: #{tpu_custom_call.1} parent=1 // pred_region
      %s26 = ssub.s32 128, 128
      %27 = vsyncadd [#allocation7], %s26
      %s29 = sshll.u32 [#allocation6], 4
      %s30 = int_to_ptr.vmem [resolvable:$true] %s29
      %32 = dma.hbm_to_vmem [thread:$0]  %s1, 128, %s30, [#allocation7]
    $region9: #{tpu_custom_call.1} parent=1 // pred_fallthru
      _
    // Predicated region
    $region10: #{tpu_custom_call.1} parent=1 // pred_check
      _
    $region11: #{tpu_custom_call.1} parent=1 // pred_check_branch
      %34 = sbr.rel (0) target = $region13
    $region12: #{tpu_custom_call.1} parent=1 // pred_region
      _
    $region13: #{tpu_custom_call.1} parent=1 // pred_fallthru
      _
    // Predicated region
    $region14: #{tpu_custom_call.1} parent=1 // pred_check
      _
    $region15: #{tpu_custom_call.1} parent=1 // pred_check_branch
      %36 = sbr.rel (0) target = $region17
    $region16: #{tpu_custom_call.1} parent=1 // pred_region
      %s38 = ssub.s32 2048, 2048
      %39 = vsyncadd [#allocation7], %s38
      %s40 = sshll.u32 [#allocation8], 4
      %s41 = int_to_ptr.vmem [resolvable:$true] %s40
      %46 = dma.hbm_to_vmem [thread:$0]  %s3, 2048, %s41, [#allocation7], 128, 128, 8
    $region17: #{tpu_custom_call.1} parent=1 // pred_fallthru
      _
    // Predicated region
    $region18: #{tpu_custom_call.1} parent=1 // pred_check
      _
    $region19: #{tpu_custom_call.1} parent=1 // pred_check_branch
      %48 = sbr.rel (0) target = $region21
    $region20: #{tpu_custom_call.1} parent=1 // pred_region
      _
    $region21: #{tpu_custom_call.1} parent=1 // pred_fallthru
      _
    // Predicated region
    $region22: #{tpu_custom_call.1} parent=1 // pred_check
      _
    $region23: #{tpu_custom_call.1} parent=1 // pred_check_branch
      %50 = sbr.rel (0) target = $region25
    $region24: #{tpu_custom_call.1} parent=1 // pred_region
      %51 = dma.done [#allocation4], 128
    $region25: #{tpu_custom_call.1} parent=1 // pred_fallthru
      _
    // Predicated region
    $region26: #{tpu_custom_call.1} parent=1 // pred_check
      _
    $region27: #{tpu_custom_call.1} parent=1 // pred_check_branch
      %53 = sbr.rel (0) target = $region29
    $region28: #{tpu_custom_call.1} parent=1 // pred_region
      %54 = dma.done [#allocation7], 128
    $region29: #{tpu_custom_call.1} parent=1 // pred_fallthru
      _
    // Predicated region
    $region30: #{tpu_custom_call.1} parent=1 // pred_check
      _
    $region31: #{tpu_custom_call.1} parent=1 // pred_check_branch
      %56 = sbr.rel (0) target = $region33
    $region32: #{tpu_custom_call.1} parent=1 // pred_region
      %57 = dma.done [#allocation7], 2048
    $region33: #{tpu_custom_call.1} parent=1 // pred_fallthru
      _
    %p58 = scmp.eq.s32.totalorder 0, 0
    // Predicated region
    $region34: #{tpu_custom_call.1} parent=1 // pred_check
      %p59 = pneg %p58
    $region35: #{tpu_custom_call.1} parent=1 // pred_check_branch
      %61 = sbr.rel (%p59) target = $region37
    $region36: #{tpu_custom_call.1} parent=1 // pred_region
      %v62 = vld [vmem:[#allocation3] sm:$0xff]
      %v63 = vld [vmem:[#allocation6] sm:$0xff]
      %v64 = vld [vmem:[%s2] sm:$0x1]
      %v66 = vlaneseq
      %v67 = vshrl.u32 %v66, 7
      %v68 = vsub.s32 0, %v67
      %v69 = vrot.slane %v64, %v68
      %vm71 = vcmask 64512
      %v73 = vsel %vm71, %v62, 0
      %75 = vmatprep.subr.mxu0 0.0
      %76 = vmatpush1.msra.mxu0 %v63
      %77 = vmatprep.subr.mxu0 0.0
      %78 = vmatpush1.msra.mxu0 0.0
      %79 = vmatprep.subr.mxu0 0.0
      %80 = vmatpush1.msra.mxu0 0.0
      %81 = vmatprep.subr.mxu0 0.0
      %82 = vmatpush1.msra.mxu0 0.0
      %83 = vmatprep.subr.mxu0 0.0
      %84 = vmatpush1.msra.mxu0 0.0
      %85 = vmatprep.subr.mxu0 0.0
      %86 = vmatpush1.msra.mxu0 0.0
      %87 = vmatprep.subr.mxu0 0.0
      %88 = vmatpush1.msra.mxu0 0.0
      %89 = vmatprep.subr.mxu0 0.0
      %90 = vmatpush1.msra.mxu0 0.0
      %91 = vmatprep.subr.mxu0 0.0
      %92 = vmatpush1.msra.mxu0 0.0
      %93 = vmatprep.subr.mxu0 0.0
      %94 = vmatpush1.msra.mxu0 0.0
      %95 = vmatprep.subr.mxu0 0.0
      %96 = vmatpush1.msra.mxu0 0.0
      %97 = vmatprep.subr.mxu0 0.0
      %98 = vmatpush1.msra.mxu0 0.0
      %99 = vmatprep.subr.mxu0 0.0
      %100 = vmatpush1.msra.mxu0 0.0
      %101 = vmatprep.subr.mxu0 0.0
      %102 = vmatpush1.msra.mxu0 0.0
      %103 = vmatprep.subr.mxu0 0.0
      %104 = vmatpush1.msra.mxu0 0.0
      %105 = vmatprep.subr.mxu0 0.0
      %106 = vmatpush1.msra.mxu0 0.0
      %107 = vmatprep.subr.mxu0 0.0
      %108 = vmatpush1.msra.mxu0 0.0
      %109 = vmatprep.subr.mxu0 0.0
      %110 = vmatpush1.msra.mxu0 0.0
      %111 = vmatprep.subr.mxu0 0.0
      %112 = vmatpush1.msra.mxu0 0.0
      %113 = vmatprep.subr.mxu0 0.0
      %114 = vmatpush1.msra.mxu0 0.0
      %115 = vmatprep.subr.mxu0 0.0
      %116 = vmatpush1.msra.mxu0 0.0
      %117 = vmatprep.subr.mxu0 0.0
      %118 = vmatpush1.msra.mxu0 0.0
      %119 = vmatprep.subr.mxu0 0.0
      %120 = vmatpush1.msra.mxu0 0.0
      %121 = vmatprep.subr.mxu0 0.0
      %122 = vmatpush1.msra.mxu0 0.0
      %123 = vmatprep.subr.mxu0 0.0
      %124 = vmatpush1.msra.mxu0 0.0
      %125 = vmatprep.subr.mxu0 0.0
      %126 = vmatpush1.msra.mxu0 0.0
      %127 = vmatprep.subr.mxu0 0.0
      %128 = vmatpush1.msra.mxu0 0.0
      %129 = vmatprep.subr.mxu0 0.0
      %130 = vmatpush1.msra.mxu0 0.0
      %131 = vmatprep.subr.mxu0 0.0
      %132 = vmatpush1.msra.mxu0 0.0
      %133 = vmatprep.subr.mxu0 0.0
      %134 = vmatpush1.msra.mxu0 0.0
      %135 = vmatprep.subr.mxu0 0.0
      %136 = vmatpush1.msra.mxu0 0.0
      %137 = vmatprep.subr.mxu0 0.0
      %138 = vmatpush1.msra.mxu0 0.0
      %139 = vmatprep.mubr.f32.mxu0 0.0
      %140 = vmatmul.mubr.f32.gmra.mrb[0].mxu0 %v73
      %v141 = vpop.f32.mrb[0].mxu0
      %v142 = vadd.f32 %v69, %v141
      %v143 = vpop.f32.mrb[0].mxu0
      %144 = vdwg.mxu0
      %v145 = vtanh.pop %v142
      %146 = vst [vmem:[#allocation2] sm:$0xff] %v145
    $region37: #{tpu_custom_call.1} parent=1 // pred_fallthru
      _
    %v147 = vld [vmem:[#allocation2] sm:$0xff]
    %v148 = vld [vmem:[#allocation8] sm:$0xff]
    %v149 = vld [vmem:[#allocation8 + $0x8] sm:$0xff]
    %v150 = vld [vmem:[#allocation8 + $0x10] sm:$0xff]
    %v151 = vld [vmem:[#allocation8 + $0x18] sm:$0xff]
    %v152 = vld [vmem:[#allocation8 + $0x20] sm:$0xff]
    %v153 = vld [vmem:[#allocation8 + $0x28] sm:$0xff]
    %v154 = vld [vmem:[#allocation8 + $0x30] sm:$0xff]
    %v155 = vld [vmem:[#allocation8 + $0x38] sm:$0xff]
    %v156 = vld [vmem:[#allocation8 + $0x40] sm:$0xff]
    %v157 = vld [vmem:[#allocation8 + $0x48] sm:$0xff]
    %v158 = vld [vmem:[#allocation8 + $0x50] sm:$0xff]
    %v159 = vld [vmem:[#allocation8 + $0x58] sm:$0xff]
    %v160 = vld [vmem:[#allocation8 + $0x60] sm:$0xff]
    %v161 = vld [vmem:[#allocation8 + $0x68] sm:$0xff]
    %v162 = vld [vmem:[#allocation8 + $0x70] sm:$0xff]
    %v163 = vld [vmem:[#allocation8 + $0x78] sm:$0xff]
    %v164 = vld [vmem:[%s4] sm:$0x1]
    %v166 = vlaneseq
    %v167 = vshrl.u32 %v166, 7
    %v168 = vsub.s32 0, %v167
    %v169 = vrot.slane %v164, %v168
    %171 = vmatprep.subr.mxu0 0.0
    %172 = vmatpush1.msra.mxu0 %v148
    %173 = vmatprep.subr.mxu0 0.0
    %174 = vmatpush1.msra.mxu0 %v149
    %175 = vmatprep.subr.mxu0 0.0
    %176 = vmatpush1.msra.mxu0 %v150
    %177 = vmatprep.subr.mxu0 0.0
    %178 = vmatpush1.msra.mxu0 %v151
    %179 = vmatprep.subr.mxu0 0.0
    %180 = vmatpush1.msra.mxu0 %v152
    %181 = vmatprep.subr.mxu0 0.0
    %182 = vmatpush1.msra.mxu0 %v153
    %183 = vmatprep.subr.mxu0 0.0
    %184 = vmatpush1.msra.mxu0 %v154
    %185 = vmatprep.subr.mxu0 0.0
    %186 = vmatpush1.msra.mxu0 %v155
    %187 = vmatprep.subr.mxu0 0.0
    %188 = vmatpush1.msra.mxu0 %v156
    %189 = vmatprep.subr.mxu0 0.0
    %190 = vmatpush1.msra.mxu0 %v157
    %191 = vmatprep.subr.mxu0 0.0
    %192 = vmatpush1.msra.mxu0 %v158
    %193 = vmatprep.subr.mxu0 0.0
    %194 = vmatpush1.msra.mxu0 %v159
    %195 = vmatprep.subr.mxu0 0.0
    %196 = vmatpush1.msra.mxu0 %v160
    %197 = vmatprep.subr.mxu0 0.0
    %198 = vmatpush1.msra.mxu0 %v161
    %199 = vmatprep.subr.mxu0 0.0
    %200 = vmatpush1.msra.mxu0 %v162
    %201 = vmatprep.subr.mxu0 0.0
    %202 = vmatpush1.msra.mxu0 %v163
    %203 = vmatprep.subr.mxu0 0.0
    %204 = vmatpush1.msra.mxu0 0.0
    %205 = vmatprep.subr.mxu0 0.0
    %206 = vmatpush1.msra.mxu0 0.0
    %207 = vmatprep.subr.mxu0 0.0
    %208 = vmatpush1.msra.mxu0 0.0
    %209 = vmatprep.subr.mxu0 0.0
    %210 = vmatpush1.msra.mxu0 0.0
    %211 = vmatprep.subr.mxu0 0.0
    %212 = vmatpush1.msra.mxu0 0.0
    %213 = vmatprep.subr.mxu0 0.0
    %214 = vmatpush1.msra.mxu0 0.0
    %215 = vmatprep.subr.mxu0 0.0
    %216 = vmatpush1.msra.mxu0 0.0
    %217 = vmatprep.subr.mxu0 0.0
    %218 = vmatpush1.msra.mxu0 0.0
    %219 = vmatprep.subr.mxu0 0.0
    %220 = vmatpush1.msra.mxu0 0.0
    %221 = vmatprep.subr.mxu0 0.0
    %222 = vmatpush1.msra.mxu0 0.0
    %223 = vmatprep.subr.mxu0 0.0
    %224 = vmatpush1.msra.mxu0 0.0
    %225 = vmatprep.subr.mxu0 0.0
    %226 = vmatpush1.msra.mxu0 0.0
    %227 = vmatprep.subr.mxu0 0.0
    %228 = vmatpush1.msra.mxu0 0.0
    %229 = vmatprep.subr.mxu0 0.0
    %230 = vmatpush1.msra.mxu0 0.0
    %231 = vmatprep.subr.mxu0 0.0
    %232 = vmatpush1.msra.mxu0 0.0
    %233 = vmatprep.subr.mxu0 0.0
    %234 = vmatpush1.msra.mxu0 0.0
    %235 = vmatprep.mubr.f32.mxu0 0.0
    %236 = vmatmul.mubr.f32.gmra.mrb[0].mxu0 %v147
    %v237 = vpop.f32.mrb[0].mxu0
    %v238 = vadd.f32 %v169, %v237
    %v239 = vpop.f32.mrb[0].mxu0
    %240 = vdwg.mxu0
    %241 = vst [vmem:[#allocation9] sm:$0xff] %v238
    // Predicated region
    $region38: #{tpu_custom_call.1} parent=1 // pred_check
      _
    $region39: #{tpu_custom_call.1} parent=1 // pred_check_branch
      %243 = sbr.rel (0) target = $region41
    $region40: #{tpu_custom_call.1} parent=1 // pred_region
      %s245 = ssub.s32 128, 128
      %246 = vsyncadd [#allocation5], %s245
      %s248 = sshll.u32 [#allocation9], 4
      %s249 = int_to_ptr.vmem [resolvable:$true] %s248
      %251 = dma.vmem_to_hbm [thread:$0]  %s249, 128, %s5, [#allocation5]
    $region41: #{tpu_custom_call.1} parent=1 // pred_fallthru
      _
    // Predicated region
    $region42: #{tpu_custom_call.1} parent=1 // pred_check
      _
    $region43: #{tpu_custom_call.1} parent=1 // pred_check_branch
      %253 = sbr.rel (0) target = $region45
    $region44: #{tpu_custom_call.1} parent=1 // pred_region
      %254 = dma.done [#allocation5], 128
    $region45: #{tpu_custom_call.1} parent=1 // pred_fallthru
      _
    %255 = vsyncpa [#allocation4], 1
    %256 = vsyncpa [#allocation7], 1
    %257 = vsyncpa [#allocation5], 1

</llo_original>
